<compile_context>
chip_gen: v6e
topology: v6e:2x2x1
jax: 0.10.0
libtpu: 0.0.40
codegen_flags: <defaults>
</compile_context>

<pallas_src>
import functools
import inspect
import math

import numpy as np

import jax
import jax.numpy as jnp
from jax.experimental import pallas as pl
from jax.experimental.pallas import tpu as pltpu


# ---------------------------------------------------------------------------
# Small helpers
# ---------------------------------------------------------------------------
def _round_up(v, m):
    return ((v + m - 1) // m) * m


def _vmem_capacity_bytes():
    """Physical VMEM per TensorCore (128 MiB v5e/v6e, 64 MiB v7x)."""
    try:
        return int(pltpu.get_tpu_info().vmem_capacity_bytes)
    except Exception:
        return 64 * 1024 * 1024  # conservative (v7x-sized) fallback


def _mxu_align(cdtype):
    """Feature-dim alignment: 256 fills the 256x256 MXU on v6e/v7x for 16-bit
    dtypes; 128 otherwise (v5e MXU is 128x128)."""
    if jnp.dtype(cdtype).itemsize != 2:
        return 128
    try:
        kind = jax.devices()[0].device_kind.lower()
    except Exception:
        return 128
    return 256 if ("v6" in kind or "v7" in kind) else 128


def _pad_dim(d, align):
    return _round_up(d, 128) if d <= 128 else _round_up(d, align)


def _pick_tm(m, row_align, fits):
    if m <= 128:
        return _round_up(max(m, 1), row_align)
    for cand in (512, 256, 128):
        if m >= cand and fits(cand):
            return cand
    return 128


def _vmem_limit_bytes(est, cap):
    lo = 16 << 20
    hi = max(cap - (4 << 20), lo)
    want = max(int(est * 1.5) + (4 << 20), lo)
    return int(min(want, hi))


def _resident_spec(block_shape, index_map):
    """BlockSpec for a block whose index_map is constant: it is fetched once
    and never revisited, so a single pipeline buffer suffices (halves its VMEM
    footprint vs. default double buffering). Falls back gracefully on jax
    versions without pipeline_mode."""
    try:
        if hasattr(pl, "Buffered") and (
                "pipeline_mode" in inspect.signature(pl.BlockSpec).parameters):
            return pl.BlockSpec(block_shape, index_map,
                                pipeline_mode=pl.Buffered(1))
    except Exception:
        pass
    return pl.BlockSpec(block_shape, index_map)


# ---------------------------------------------------------------------------
# Fused kernel: all weights resident in VMEM, activations never leave VMEM.
# ---------------------------------------------------------------------------
def _fused_mlp_kernel(x_ref, w0_ref, wr_ref, b_ref, o_ref, *,
                      num_layers, acti_fini):
    cdtype = x_ref.dtype
    nh = num_layers - 1                      # number of stacked (hidden) layers

    # Layer 0: [tm, Kpad_in] @ [Kpad_in, Npad], f32 accumulation on the MXU.
    y = jnp.dot(x_ref[...], w0_ref[...], preferred_element_type=jnp.float32)
    y = y + b_ref[0].astype(jnp.float32)
    if acti_fini or nh > 0:
        y = jnp.maximum(y, 0.0)

    if nh == 0:
        o_ref[...] = y.astype(o_ref.dtype)
        return

    def hidden_layer(l, h):
        z = jnp.dot(h.astype(cdtype), wr_ref[l],
                    preferred_element_type=jnp.float32)
        z = z + b_ref[l + 1].astype(jnp.float32)
        return jnp.maximum(z, 0.0)

    # All hidden layers but the last; fori_loop bounds live ranges for deep
    # MLPs (last layer peeled for the dtype cast + single HBM writeback).
    if nh - 1 >= 3:
        h = jax.lax.fori_loop(0, nh - 1, hidden_layer, y)
    else:
        h = y
        for l in range(nh - 1):
            h = hidden_layer(l, h)

    z = jnp.dot(h.astype(cdtype), wr_ref[nh - 1],
                preferred_element_type=jnp.float32)
    z = z + b_ref[nh].astype(jnp.float32)
    if acti_fini:
        z = jnp.maximum(z, 0.0)
    o_ref[...] = z.astype(o_ref.dtype)


def _mlp_fused(x2d, w0p, wr_stack, b_stack, *, num_layers, acti_fini,
               out_dtype, tm, vmem_limit):
    mpad, kpad_in = x2d.shape
    npad = w0p.shape[1]
    kernel = functools.partial(_fused_mlp_kernel, num_layers=num_layers,
                               acti_fini=acti_fini)
    return pl.pallas_call(
        kernel,
        out_shape=jax.ShapeDtypeStruct((mpad, npad), out_dtype),
        grid=(mpad // tm,),
        in_specs=[
            pl.BlockSpec((tm, kpad_in), lambda i: (i, 0)),
            _resident_spec(w0p.shape, lambda i: (0, 0)),
            _resident_spec(wr_stack.shape, lambda i: (0, 0, 0)),
            _resident_spec(b_stack.shape, lambda i: (0, 0, 0)),
        ],
        out_specs=pl.BlockSpec((tm, npad), lambda i: (i, 0)),
        compiler_params=pltpu.CompilerParams(
            # TODO(synk): pltpu.CORE_PARALLEL here for v7x's 2 TensorCores.
            dimension_semantics=("parallel",),
            vmem_limit_bytes=vmem_limit,
        ),
    )(x2d, w0p, wr_stack, b_stack)


# ---------------------------------------------------------------------------
# Weight-streaming kernel (fallback when the resident stack doesn't fit VMEM):
# activations stay resident per row tile, hidden-layer weights are manually
# double-buffered from HBM with async DMA.
# ---------------------------------------------------------------------------
def _stream_mlp_kernel(x_ref, w0_ref, b_ref, wr_hbm, o_ref,
                       h_sc, wbuf, sem, *, num_layers, acti_fini):
    cdtype = x_ref.dtype
    nh = num_layers - 1

    # Prime the DMA of the first streamed layer so it overlaps layer 0's matmul.
    if nh > 0:
        pltpu.make_async_copy(wr_hbm.at[0], wbuf.at[0], sem.at[0]).start()

    y = jnp.dot(x_ref[...], w0_ref[...], preferred_element_type=jnp.float32)
    y = y + b_ref[0].astype(jnp.float32)
    if acti_fini or nh > 0:
        y = jnp.maximum(y, 0.0)

    if nh == 0:
        o_ref[...] = y.astype(o_ref.dtype)
        return

    h_sc[...] = y              # activations stay resident in VMEM across layers

    @pl.loop(0, nh)
    def _(l):
        slot = l % 2
        pltpu.make_async_copy(wr_hbm.at[l], wbuf.at[slot], sem.at[slot]).wait()

        @pl.when(l + 1 < nh)
        def _prefetch_next():
            nslot = 1 - slot
            pltpu.make_async_copy(wr_hbm.at[l + 1], wbuf.at[nslot],
                                  sem.at[nslot]).start()

        z = jnp.dot(h_sc[...].astype(cdtype), wbuf[slot],
                    preferred_element_type=jnp.float32)
        z = z + b_ref[l + 1].astype(jnp.float32)
        zr = jnp.maximum(z, 0.0)
        is_last = l == nh - 1

        @pl.when(jnp.logical_not(is_last))
        def _carry():
            h_sc[...] = zr

        @pl.when(is_last)
        def _writeback():
            o_ref[...] = (zr if acti_fini else z).astype(o_ref.dtype)


def _mlp_stream(x2d, w0p, wr_stack, b_stack, *, num_layers, acti_fini,
                out_dtype, tm, vmem_limit):
    mpad, kpad_in = x2d.shape
    npad = w0p.shape[1]
    cdtype = x2d.dtype
    kernel = functools.partial(_stream_mlp_kernel, num_layers=num_layers,
                               acti_fini=acti_fini)
    return pl.pallas_call(
        kernel,
        out_shape=jax.ShapeDtypeStruct((mpad, npad), out_dtype),
        grid=(mpad // tm,),
        in_specs=[
            pl.BlockSpec((tm, kpad_in), lambda i: (i, 0)),
            _resident_spec(w0p.shape, lambda i: (0, 0)),
            _resident_spec(b_stack.shape, lambda i: (0, 0, 0)),
            pl.BlockSpec(memory_space=pl.ANY),      # hidden weights stay in HBM
        ],
        out_specs=pl.BlockSpec((tm, npad), lambda i: (i, 0)),
        scratch_shapes=[
            pltpu.VMEM((tm, npad), jnp.float32),    # resident activations
            pltpu.VMEM((2, npad, npad), cdtype),    # streamed-weight double buffer
            pltpu.SemaphoreType.DMA((2,)),
        ],
        compiler_params=pltpu.CompilerParams(
            dimension_semantics=("parallel",),
            vmem_limit_bytes=vmem_limit,
        ),
    )(x2d, w0p, b_stack, wr_stack)


# ---------------------------------------------------------------------------
# Params + forward wrapper (matches PyTorch MLP semantics).
# ---------------------------------------------------------------------------
def init_mlp_params(key, num_layers, in_features, out_channels,
                    dtype=jnp.float32):
    """kaiming_uniform weights (bound = sqrt(6/fan_in)), zero biases — mirrors
    LINEAR_INIT. Weights stored pre-transposed as [D_in, D_out]."""
    params = []
    fan_in = in_features
    for _ in range(num_layers):
        key, wk = jax.random.split(key)
        bound = math.sqrt(6.0 / fan_in)
        w = jax.random.uniform(wk, (fan_in, out_channels),
                               minval=-bound, maxval=bound, dtype=dtype)
        b = jnp.zeros((out_channels,), dtype=dtype)
        params.append((w, b))
        fan_in = out_channels
    return params


def make_mlp_forward(params, acti_fini=False, compute_dtype=None,
                     force_stream=False):
    """Pad + stack the parameters ONCE and return fwd(x): [..., d_in] -> [..., C].

    compute_dtype sets the MXU input dtype for weights/activations (f32
    accumulation either way); jnp.bfloat16 is recommended on every TPU
    generation (v5e's MXU is bf16-native). Default keeps the parameter dtype
    for exact parity with the PyTorch module."""
    num_layers = len(params)
    assert num_layers >= 1
    d_in = params[0][0].shape[0]
    d_out = params[0][0].shape[1]
    for li, (w, b) in enumerate(params):
        exp_in = d_in if li == 0 else d_out
        assert w.shape == (exp_in, d_out) and b.shape == (d_out,)

    cdtype = (jnp.dtype(compute_dtype) if compute_dtype is not None
              else jnp.dtype(params[0][0].dtype))
    align = _mxu_align(cdtype)
    kpad_in = _pad_dim(d_in, align)
    npad = _pad_dim(d_out, align)
    isz = cdtype.itemsize
    row_align = 16 if isz == 2 else 8

    # --- one-time parameter prep (hoisted out of the per-call path) ----------
    # Zero padding keeps the math exact: padded x columns are zero, padded W
    # rows/cols and bias entries are zero, and ReLU(0)=0, so the pad region
    # stays zero through every layer; padded rows are sliced off on return.
    w0, _ = params[0]
    w0p = jnp.zeros((kpad_in, npad), cdtype).at[:d_in, :d_out].set(
        w0.astype(cdtype))
    hidden = [jnp.zeros((npad, npad), cdtype).at[:d_out, :d_out].set(
        w.astype(cdtype)) for (w, _) in params[1:]]
    if hidden:
        wr_stack = jnp.stack(hidden)                   # [L-1, Npad, Npad]
    else:
        wr_stack = jnp.zeros((1, 8, 128), cdtype)      # unused dummy (L == 1)
    b_stack = jnp.stack([
        jnp.zeros((1, npad), cdtype).at[0, :d_out].set(b.astype(cdtype))
        for (_, b) in params])                          # [L, 1, Npad]

    cap = _vmem_capacity_bytes()
    budget = int(cap * 0.75)
    res_bytes = int(w0p.size + wr_stack.size + b_stack.size) * isz

    def fwd(x):
        assert x.shape[-1] == d_in
        out_dtype = x.dtype
        osz = jnp.dtype(out_dtype).itemsize
        lead = x.shape[:-1]
        x2d = x.reshape(-1, d_in).astype(cdtype)
        m = x2d.shape[0]

        # VMEM estimates (bytes) per row tile t: double-buffered x/out tiles +
        # resident weights/bias + f32 intermediates.
        def fused_bytes(t):
            return (2 * t * kpad_in * isz + 2 * t * npad * osz
                    + res_bytes + 3 * t * npad * 4)

        def stream_bytes(t):
            return (2 * t * kpad_in * isz + 2 * t * npad * osz
                    + int(w0p.size + b_stack.size) * isz
                    + 2 * npad * npad * isz          # streamed-weight buffers
                    + 3 * t * npad * 4)              # resident h + f32 temps

        tm = _pick_tm(m, row_align, lambda t: fused_bytes(t) <= budget)
        use_fused = (not force_stream) and fused_bytes(tm) <= budget
        if not use_fused:
            tm = _pick_tm(m, row_align, lambda t: stream_bytes(t) <= budget)
        mpad = _round_up(m, tm)

        xp = jnp.zeros((mpad, kpad_in), cdtype).at[:m, :d_in].set(x2d)

        if use_fused:
            yp = _mlp_fused(
                xp, w0p, wr_stack, b_stack, num_layers=num_layers,
                acti_fini=acti_fini, out_dtype=out_dtype, tm=tm,
                vmem_limit=_vmem_limit_bytes(fused_bytes(tm), cap))
        else:
            # TODO(synk): N-chunk the streamed weight tiles when a single
            # [Npad, Npad] layer no longer fits the VMEM double buffer.
            yp = _mlp_stream(
                xp, w0p, wr_stack, b_stack, num_layers=num_layers,
                acti_fini=acti_fini, out_dtype=out_dtype, tm=tm,
                vmem_limit=_vmem_limit_bytes(stream_bytes(tm), cap))

        return yp[:m, :d_out].reshape(*lead, d_out)

    return fwd


def mlp_forward(x, params, acti_fini=False, compute_dtype=None,
                force_stream=False):
    """One-shot convenience wrapper (prefer make_mlp_forward for repeated use
    so padding/stacking is not redone per call)."""
    return make_mlp_forward(params, acti_fini=acti_fini,
                            compute_dtype=compute_dtype,
                            force_stream=force_stream)(x)


# ---------------------------------------------------------------------------
# Reference (float64 numpy — avoids TPU matmul-precision ambiguity).
# ---------------------------------------------------------------------------
def _reference_np(x, params, acti_fini=False):
    lead = x.shape[:-1]
    y = np.asarray(x, np.float64).reshape(-1, x.shape[-1])
    n = len(params)
    for li, (w, b) in enumerate(params):
        y = y @ np.asarray(w, np.float64) + np.asarray(b, np.float64)[None, :]
        if acti_fini or (li < n - 1):
            y = np.maximum(y, 0.0)
    return y.reshape(*lead, params[-1][0].shape[1])


if __name__ == "__main__":
    key = jax.random.PRNGKey(0)
    kx, kp, kp2 = jax.random.split(key, 3)

    batch, seq, d_in = 2, 8, 48
    out_channels = 32
    num_layers = 3

    x = jax.random.normal(kx, (batch, seq, d_in), dtype=jnp.float32)
    params = init_mlp_params(kp, num_layers, d_in, out_channels)

    ref = _reference_np(x, params, acti_fini=False)
    ref_fini = _reference_np(x, params, acti_fini=True)

    def close(a, b, tol):
        return bool(jnp.allclose(jnp.asarray(a, jnp.float32),
                                 jnp.asarray(b, jnp.float32),
                                 atol=tol, rtol=tol))

    # 1) Fused resident-weight kernel (primary path).
    out = jax.block_until_ready(make_mlp_forward(params, acti_fini=False)(x))
    assert out.shape == (batch, seq, out_channels)
    assert close(out, ref, 2e-2)

    # acti_fini=True keeps the final ReLU.
    out_fini = jax.block_until_ready(
        make_mlp_forward(params, acti_fini=True)(x))
    assert close(out_fini, ref_fini, 2e-2)

    # 2) Weight-streaming fallback (HBM weights, manual DMA double buffer).
    out_stream = jax.block_until_ready(
        make_mlp_forward(params, acti_fini=False, force_stream=True)(x))
    assert close(out_stream, ref, 2e-2)

    # 3) bf16 compute (f32 accumulation) — recommended on all generations.
    out_bf16 = jax.block_until_ready(
        make_mlp_forward(params, acti_fini=False,
                         compute_dtype=jnp.bfloat16)(x))
    assert out_bf16.shape == (batch, seq, out_channels)
    assert out_bf16.dtype == x.dtype
    assert bool(jnp.all(jnp.isfinite(out_bf16)))
    assert close(out_bf16, ref, 1.5e-1)

    # 4) Deeper MLP exercises the in-kernel fori_loop hidden-layer path.
    params_deep = init_mlp_params(kp2, 6, d_in, out_channels)
    ref_deep = _reference_np(x, params_deep, acti_fini=False)
    out_deep = jax.block_until_ready(make_mlp_forward(params_deep)(x))
    assert close(out_deep, ref_deep, 5e-2)

    # 5) Single-layer corner (no hidden weight stack).
    params_one = init_mlp_params(kp2, 1, d_in, out_channels)
    ref_one = _reference_np(x, params_one, acti_fini=False)
    out_one = jax.block_until_ready(make_mlp_forward(params_one)(x))
    assert close(out_one, ref_one, 2e-2)

    print("KERNEL_OK")
</pallas_src>

<mosaic_0001>
module attributes {stable_mosaic.version = 11 : i64} {
  func.func @_fused_mlp_kernel(%arg0: i32, %arg1: memref<16x128xf32, #tpu.memory_space<vmem>>, %arg2: memref<128x128xf32, #tpu.memory_space<vmem>>, %arg3: memref<2x128x128xf32, #tpu.memory_space<vmem>>, %arg4: memref<3x1x128xf32, #tpu.memory_space<vmem>>, %arg5: memref<16x128xf32, #tpu.memory_space<vmem>>) attributes {dimension_semantics = [#tpu.dimension_semantics<parallel>], iteration_bounds = array<i64: 1>, scalar_prefetch = 0 : i64, scratch_operands = 0 : i64, tpu.core_type = #tpu.core_type<tc>, window_params = [{transform_indices = @transform_0, window_bounds = array<i64: 16, 128>}, {pipeline_mode = #tpu.pipeline_mode<synchronous>, transform_indices = @transform_1, window_bounds = array<i64: 128, 128>}, {pipeline_mode = #tpu.pipeline_mode<synchronous>, transform_indices = @transform_2, window_bounds = array<i64: 2, 128, 128>}, {pipeline_mode = #tpu.pipeline_mode<synchronous>, transform_indices = @transform_3, window_bounds = array<i64: 3, 1, 128>}, {transform_indices = @transform_4, window_bounds = array<i64: 16, 128>}]} {
    %c0 = arith.constant 0 : index
    %c0_0 = arith.constant 0 : index
    %0 = vector.load %arg1[%c0, %c0_0] : memref<16x128xf32, #tpu.memory_space<vmem>>, vector<16x128xf32>
    %c0_1 = arith.constant 0 : index
    %c0_2 = arith.constant 0 : index
    %1 = vector.load %arg2[%c0_1, %c0_2] : memref<128x128xf32, #tpu.memory_space<vmem>>, vector<128x128xf32>
    %cst = arith.constant dense<0.000000e+00> : vector<16x128xf32>
    %2 = tpu.matmul %0, %1, %cst {dimension_numbers = #tpu.dot_dimension_numbers<[1], [0], [0], [1], [0, 0, 1, 1], [], []>} : vector<16x128xf32>, vector<128x128xf32>, vector<16x128xf32> -> vector<16x128xf32>
    %c0_3 = arith.constant 0 : index
    %c0_4 = arith.constant 0 : index
    %c0_5 = arith.constant 0 : index
    %3 = vector.load %arg4[%c0_3, %c0_4, %c0_5] : memref<3x1x128xf32, #tpu.memory_space<vmem>>, vector<1x1x128xf32>
    %4 = vector.shape_cast %3 : vector<1x1x128xf32> to vector<1x128xf32>
    %5 = vector.broadcast %4 : vector<1x128xf32> to vector<16x128xf32>
    %6 = arith.addf %2, %5 : vector<16x128xf32>
    %cst_6 = arith.constant 0.000000e+00 : f32
    %7 = vector.broadcast %cst_6 : f32 to vector<16x128xf32>
    %8 = arith.maximumf %6, %7 : vector<16x128xf32>
    %c0_7 = arith.constant 0 : index
    %c0_8 = arith.constant 0 : index
    %c0_9 = arith.constant 0 : index
    %9 = vector.load %arg3[%c0_7, %c0_8, %c0_9] : memref<2x128x128xf32, #tpu.memory_space<vmem>>, vector<1x128x128xf32>
    %10 = vector.shape_cast %9 : vector<1x128x128xf32> to vector<128x128xf32>
    %cst_10 = arith.constant dense<0.000000e+00> : vector<16x128xf32>
    %11 = tpu.matmul %8, %10, %cst_10 {dimension_numbers = #tpu.dot_dimension_numbers<[1], [0], [0], [1], [0, 0, 1, 1], [], []>} : vector<16x128xf32>, vector<128x128xf32>, vector<16x128xf32> -> vector<16x128xf32>
    %c1 = arith.constant 1 : index
    %c0_11 = arith.constant 0 : index
    %c0_12 = arith.constant 0 : index
    %12 = vector.load %arg4[%c1, %c0_11, %c0_12] : memref<3x1x128xf32, #tpu.memory_space<vmem>>, vector<1x1x128xf32>
    %13 = vector.shape_cast %12 : vector<1x1x128xf32> to vector<1x128xf32>
    %14 = vector.broadcast %13 : vector<1x128xf32> to vector<16x128xf32>
    %15 = arith.addf %11, %14 : vector<16x128xf32>
    %cst_13 = arith.constant 0.000000e+00 : f32
    %16 = vector.broadcast %cst_13 : f32 to vector<16x128xf32>
    %17 = arith.maximumf %15, %16 : vector<16x128xf32>
    %c1_14 = arith.constant 1 : index
    %c0_15 = arith.constant 0 : index
    %c0_16 = arith.constant 0 : index
    %18 = vector.load %arg3[%c1_14, %c0_15, %c0_16] : memref<2x128x128xf32, #tpu.memory_space<vmem>>, vector<1x128x128xf32>
    %19 = vector.shape_cast %18 : vector<1x128x128xf32> to vector<128x128xf32>
    %cst_17 = arith.constant dense<0.000000e+00> : vector<16x128xf32>
    %20 = tpu.matmul %17, %19, %cst_17 {dimension_numbers = #tpu.dot_dimension_numbers<[1], [0], [0], [1], [0, 0, 1, 1], [], []>} : vector<16x128xf32>, vector<128x128xf32>, vector<16x128xf32> -> vector<16x128xf32>
    %c2 = arith.constant 2 : index
    %c0_18 = arith.constant 0 : index
    %c0_19 = arith.constant 0 : index
    %21 = vector.load %arg4[%c2, %c0_18, %c0_19] : memref<3x1x128xf32, #tpu.memory_space<vmem>>, vector<1x1x128xf32>
    %22 = vector.shape_cast %21 : vector<1x1x128xf32> to vector<1x128xf32>
    %23 = vector.broadcast %22 : vector<1x128xf32> to vector<16x128xf32>
    %24 = arith.addf %20, %23 : vector<16x128xf32>
    %c0_20 = arith.constant 0 : index
    %c0_21 = arith.constant 0 : index
    %25 = vector.load %arg5[%c0_20, %c0_21] : memref<16x128xf32, #tpu.memory_space<vmem>>, vector<16x128xf32>
    tpu.vector_store %arg5[%c0_20, %c0_21], %24 {strides = array<i32>} : memref<16x128xf32, #tpu.memory_space<vmem>>, vector<16x128xf32>,
    return
  }
  func.func @transform_0(%arg0: i32) -> (i32, i32) {
    %c0_i32 = arith.constant 0 : i32
    %c0_i32_0 = arith.constant 0 : i32
    return %arg0, %c0_i32 : i32, i32
  }
  func.func @transform_1(%arg0: i32) -> (i32, i32) {
    %c0_i32 = arith.constant 0 : i32
    %c0_i32_0 = arith.constant 0 : i32
    %c0_i32_1 = arith.constant 0 : i32
    return %c0_i32, %c0_i32_0 : i32, i32
  }
  func.func @transform_2(%arg0: i32) -> (i32, i32, i32) {
    %c0_i32 = arith.constant 0 : i32
    %c0_i32_0 = arith.constant 0 : i32
    %c0_i32_1 = arith.constant 0 : i32
    %c0_i32_2 = arith.constant 0 : i32
    return %c0_i32, %c0_i32_0, %c0_i32_1 : i32, i32, i32
  }
  func.func @transform_3(%arg0: i32) -> (i32, i32, i32) {
    %c0_i32 = arith.constant 0 : i32
    %c0_i32_0 = arith.constant 0 : i32
    %c0_i32_1 = arith.constant 0 : i32
    %c0_i32_2 = arith.constant 0 : i32
    return %c0_i32, %c0_i32_0, %c0_i32_1 : i32, i32, i32
  }
  func.func @transform_4(%arg0: i32) -> (i32, i32) {
    %c0_i32 = arith.constant 0 : i32
    %c0_i32_0 = arith.constant 0 : i32
    return %arg0, %c0_i32 : i32, i32
  }
}

</mosaic_0001>

<llo_original>
// kernel: tpu_custom_call.1
$region0: #{tpu_custom_call.1}
  #allocation0 [shape = 'u32[]', space=smem, size = 0x4, offset = 0x4, fixed_abs, tag = 'smem constant byte address 0x4 - core index']
  #allocation1 [shape = 'u32[144,128]{1,0:T(1,128)}', space=vmem, size = 0x12000, scoped, tag = 'internal scratch']
  %s0 = inlined_call_operand.hbm [shape: f32[16,128], index: 0, kind: input, shape index: {}]
  %s1 = inlined_call_operand.hbm [shape: f32[128,128], index: 1, kind: input, shape index: {}]
  %s2 = inlined_call_operand.hbm [shape: f32[2,128,128], index: 2, kind: input, shape index: {}]
  %s3 = inlined_call_operand.vmem [shape: f32[3,1,128], index: 3, kind: input, shape index: {}]
  %s4 = inlined_call_operand.hbm [shape: f32[16,128], index: 4, kind: output, shape index: {}]
  %s5 = sld [smem:[#allocation0]]
  $region38: #{tpu_custom_call.1} parent=0
    _
  %s7 = ssub.s32 1, %s5
  %s8 = scalar_select 0, %s7, %s5
  $region1: #{tpu_custom_call.1} parent=0
    #allocation2 [shape = 'u8[8192]{0}', space=vmem, size = 0x2000, scoped, tag = 'input window, operand 0, single buffered']
    #allocation3 [shape = 's32[1]{0}', space=sflag, size = 0x4, scoped, tag = 'scoped memory for tpu_custom_call.1']
    #allocation4 [shape = 's32[1]{0}', space=sflag, size = 0x4, scoped, tag = 'scoped memory for tpu_custom_call.1']
    #allocation5 [shape = 'u8[65536]{0}', space=vmem, size = 0x10000, scoped, tag = 'input window, operand 1, single buffered']
    #allocation6 [shape = 's32[1]{0}', space=sflag, size = 0x4, scoped, tag = 'scoped memory for tpu_custom_call.1']
    #allocation7 [shape = 'u8[131072]{0}', space=vmem, size = 0x20000, scoped, tag = 'input window, operand 2, single buffered']
    #allocation8 [shape = 'u8[8192]{0}', space=vmem, size = 0x2000, scoped, tag = 'output window, operand 0, single buffered']
    %9 = vsyncpa [#allocation3], 0
    %10 = vsyncpa [#allocation6], 0
    %11 = vsyncpa [#allocation4], 0
    // Predicated region
    $region2: #{tpu_custom_call.1} parent=1 // pred_check
      _
    $region3: #{tpu_custom_call.1} parent=1 // pred_check_branch
      %13 = sbr.rel (0) target = $region5
    $region4: #{tpu_custom_call.1} parent=1 // pred_region
      %s15 = ssub.s32 256, 256
      %16 = vsyncadd [#allocation3], %s15
      %s17 = sshll.u32 [#allocation2], 4
      %s18 = int_to_ptr.vmem [resolvable:$true] %s17
      %23 = dma.hbm_to_vmem [thread:$0]  %s0, 256, %s18, [#allocation3], 128, 128, 8
    $region5: #{tpu_custom_call.1} parent=1 // pred_fallthru
      _
    // Predicated region
    $region6: #{tpu_custom_call.1} parent=1 // pred_check
      _
    $region7: #{tpu_custom_call.1} parent=1 // pred_check_branch
      %25 = sbr.rel (0) target = $region9
    $region8: #{tpu_custom_call.1} parent=1 // pred_region
      %s27 = ssub.s32 2048, 2048
      %28 = vsyncadd [#allocation6], %s27
      %s29 = sshll.u32 [#allocation5], 4
      %s30 = int_to_ptr.vmem [resolvable:$true] %s29
      %35 = dma.hbm_to_vmem [thread:$0]  %s1, 2048, %s30, [#allocation6], 128, 128, 8
    $region9: #{tpu_custom_call.1} parent=1 // pred_fallthru
      _
    // Predicated region
    $region10: #{tpu_custom_call.1} parent=1 // pred_check
      _
    $region11: #{tpu_custom_call.1} parent=1 // pred_check_branch
      %37 = sbr.rel (0) target = $region13
    $region12: #{tpu_custom_call.1} parent=1 // pred_region
      %s39 = ssub.s32 4096, 4096
      %40 = vsyncadd [#allocation6], %s39
      %s41 = sshll.u32 [#allocation7], 4
      %s42 = int_to_ptr.vmem [resolvable:$true] %s41
      %47 = dma.hbm_to_vmem [thread:$0]  %s2, 4096, %s42, [#allocation6], 128, 128, 8
    $region13: #{tpu_custom_call.1} parent=1 // pred_fallthru
      _
    // Predicated region
    $region14: #{tpu_custom_call.1} parent=1 // pred_check
      _
    $region15: #{tpu_custom_call.1} parent=1 // pred_check_branch
      %49 = sbr.rel (0) target = $region17
    $region16: #{tpu_custom_call.1} parent=1 // pred_region
      _
    $region17: #{tpu_custom_call.1} parent=1 // pred_fallthru
      _
    // Predicated region
    $region18: #{tpu_custom_call.1} parent=1 // pred_check
      _
    $region19: #{tpu_custom_call.1} parent=1 // pred_check_branch
      %51 = sbr.rel (0) target = $region21
    $region20: #{tpu_custom_call.1} parent=1 // pred_region
      %52 = dma.done [#allocation3], 256
    $region21: #{tpu_custom_call.1} parent=1 // pred_fallthru
      _
    // Predicated region
    $region22: #{tpu_custom_call.1} parent=1 // pred_check
      _
    $region23: #{tpu_custom_call.1} parent=1 // pred_check_branch
      %54 = sbr.rel (0) target = $region25
    $region24: #{tpu_custom_call.1} parent=1 // pred_region
      %55 = dma.done [#allocation6], 2048
    $region25: #{tpu_custom_call.1} parent=1 // pred_fallthru
      _
    // Predicated region
    $region26: #{tpu_custom_call.1} parent=1 // pred_check
      _
    $region27: #{tpu_custom_call.1} parent=1 // pred_check_branch
      %57 = sbr.rel (0) target = $region29
    $region28: #{tpu_custom_call.1} parent=1 // pred_region
      %58 = dma.done [#allocation6], 4096
    $region29: #{tpu_custom_call.1} parent=1 // pred_fallthru
      _
    %v59 = vld [vmem:[#allocation2] sm:$0xff]
    %v60 = vld [vmem:[#allocation2 + $0x8] sm:$0xff]
    %v61 = vld [vmem:[#allocation5] sm:$0xff]
    %v62 = vld [vmem:[#allocation5 + $0x8] sm:$0xff]
    %v63 = vld [vmem:[#allocation5 + $0x10] sm:$0xff]
    %v64 = vld [vmem:[#allocation5 + $0x18] sm:$0xff]
    %v65 = vld [vmem:[#allocation5 + $0x20] sm:$0xff]
    %v66 = vld [vmem:[#allocation5 + $0x28] sm:$0xff]
    %v67 = vld [vmem:[#allocation5 + $0x30] sm:$0xff]
    %v68 = vld [vmem:[#allocation5 + $0x38] sm:$0xff]
    %v69 = vld [vmem:[#allocation5 + $0x40] sm:$0xff]
    %v70 = vld [vmem:[#allocation5 + $0x48] sm:$0xff]
    %v71 = vld [vmem:[#allocation5 + $0x50] sm:$0xff]
    %v72 = vld [vmem:[#allocation5 + $0x58] sm:$0xff]
    %v73 = vld [vmem:[#allocation5 + $0x60] sm:$0xff]
    %v74 = vld [vmem:[#allocation5 + $0x68] sm:$0xff]
    %v75 = vld [vmem:[#allocation5 + $0x70] sm:$0xff]
    %v76 = vld [vmem:[#allocation5 + $0x78] sm:$0xff]
    %v77 = vld [vmem:[%s3] sm:$0x1]
    %v79 = vlaneseq
    %v80 = vshrl.u32 %v79, 7
    %v81 = vsub.s32 0, %v80
    %v82 = vrot.slane %v77, %v81
    %84 = vmatprep.subr.mxu0 0.0
    %85 = vmatpush1.msra.mxu0 %v76
    %86 = vmatprep.subr.mxu0 0.0
    %87 = vmatpush1.msra.mxu0 %v75
    %88 = vmatprep.subr.mxu0 0.0
    %89 = vmatpush1.msra.mxu0 %v74
    %90 = vmatprep.subr.mxu0 0.0
    %91 = vmatpush1.msra.mxu0 %v73
    %92 = vmatprep.subr.mxu0 0.0
    %93 = vmatpush1.msra.mxu0 %v72
    %94 = vmatprep.subr.mxu0 0.0
    %95 = vmatpush1.msra.mxu0 %v71
    %96 = vmatprep.subr.mxu0 0.0
    %97 = vmatpush1.msra.mxu0 %v70
    %98 = vmatprep.subr.mxu0 0.0
    %99 = vmatpush1.msra.mxu0 %v69
    %100 = vmatprep.subr.mxu0 0.0
    %101 = vmatpush1.msra.mxu0 %v68
    %102 = vmatprep.subr.mxu0 0.0
    %103 = vmatpush1.msra.mxu0 %v67
    %104 = vmatprep.subr.mxu0 0.0
    %105 = vmatpush1.msra.mxu0 %v66
    %106 = vmatprep.subr.mxu0 0.0
    %107 = vmatpush1.msra.mxu0 %v65
    %108 = vmatprep.subr.mxu0 0.0
    %109 = vmatpush1.msra.mxu0 %v64
    %110 = vmatprep.subr.mxu0 0.0
    %111 = vmatpush1.msra.mxu0 %v63
    %112 = vmatprep.subr.mxu0 0.0
    %113 = vmatpush1.msra.mxu0 %v62
    %114 = vmatprep.subr.mxu0 0.0
    %115 = vmatpush1.msra.mxu0 %v61
    %116 = vmatprep.subr.mxu0 0.0
    %117 = vmatpush2.msra.mxu0 0.0
    %118 = vmatprep.subr.mxu0 0.0
    %119 = vmatpush2.msra.mxu0 0.0
    %120 = vmatprep.subr.mxu0 0.0
    %121 = vmatpush2.msra.mxu0 0.0
    %122 = vmatprep.subr.mxu0 0.0
    %123 = vmatpush2.msra.mxu0 0.0
    %124 = vmatprep.subr.mxu0 0.0
    %125 = vmatpush2.msra.mxu0 0.0
    %126 = vmatprep.subr.mxu0 0.0
    %127 = vmatpush2.msra.mxu0 0.0
    %128 = vmatprep.subr.mxu0 0.0
    %129 = vmatpush2.msra.mxu0 0.0
    %130 = vmatprep.subr.mxu0 0.0
    %131 = vmatpush2.msra.mxu0 0.0
    %132 = vmatprep.subr.mxu0 0.0
    %133 = vmatpush2.msra.mxu0 0.0
    %134 = vmatprep.subr.mxu0 0.0
    %135 = vmatpush2.msra.mxu0 0.0
    %136 = vmatprep.subr.mxu0 0.0
    %137 = vmatpush2.msra.mxu0 0.0
    %138 = vmatprep.subr.mxu0 0.0
    %139 = vmatpush2.msra.mxu0 0.0
    %140 = vmatprep.subr.mxu0 0.0
    %141 = vmatpush2.msra.mxu0 0.0
    %142 = vmatprep.subr.mxu0 0.0
    %143 = vmatpush2.msra.mxu0 0.0
    %144 = vmatprep.subr.mxu0 0.0
    %145 = vmatpush2.msra.mxu0 0.0
    %146 = vmatprep.subr.mxu0 0.0
    %147 = vmatpush2.msra.mxu0 0.0
    %148 = vmatprep.mubr.f32.mxu0 0.0
    %149 = vmatmul.mubr.f32.gmra.mxu0 %v59
    %v150 = vpop.f32.mrf.mxu0
    %v151 = vadd.f32 %v82, %v150
    %v152 = vpop.f32.mrf.mxu0
    %153 = vmatprep.mubr.f32.mxu0 0.0
    %154 = vmatmul.mubr.f32.gmra.mxu0 %v60
    %v155 = vpop.f32.mrf.mxu0
    %v156 = vadd.f32 %v82, %v155
    %v157 = vpop.f32.mrf.mxu0
    %158 = vdwg.mxu0
    %v159 = vmax.f32 %v151, 0.0
    %v160 = vmax.f32 %v156, 0.0
    %v161 = vld [vmem:[#allocation7] sm:$0xff]
    %v162 = vld [vmem:[#allocation7 + $0x8] sm:$0xff]
    %v163 = vld [vmem:[#allocation7 + $0x10] sm:$0xff]
    %v164 = vld [vmem:[#allocation7 + $0x18] sm:$0xff]
    %v165 = vld [vmem:[#allocation7 + $0x20] sm:$0xff]
    %v166 = vld [vmem:[#allocation7 + $0x28] sm:$0xff]
    %v167 = vld [vmem:[#allocation7 + $0x30] sm:$0xff]
    %v168 = vld [vmem:[#allocation7 + $0x38] sm:$0xff]
    %v169 = vld [vmem:[#allocation7 + $0x40] sm:$0xff]
    %v170 = vld [vmem:[#allocation7 + $0x48] sm:$0xff]
    %v171 = vld [vmem:[#allocation7 + $0x50] sm:$0xff]
    %v172 = vld [vmem:[#allocation7 + $0x58] sm:$0xff]
    %v173 = vld [vmem:[#allocation7 + $0x60] sm:$0xff]
    %v174 = vld [vmem:[#allocation7 + $0x68] sm:$0xff]
    %v175 = vld [vmem:[#allocation7 + $0x70] sm:$0xff]
    %v176 = vld [vmem:[#allocation7 + $0x78] sm:$0xff]
    %s177 = scalar_lea.vmem %s3, 1
    %v178 = vld [vmem:[%s177] sm:$0x1]
    %v180 = vlaneseq
    %v181 = vshrl.u32 %v180, 7
    %v182 = vsub.s32 0, %v181
    %v183 = vrot.slane %v178, %v182
    %185 = vmatprep.subr.mxu0 0.0
    %186 = vmatpush1.msra.mxu0 %v176
    %187 = vmatprep.subr.mxu0 0.0
    %188 = vmatpush1.msra.mxu0 %v175
    %189 = vmatprep.subr.mxu0 0.0
    %190 = vmatpush1.msra.mxu0 %v174
    %191 = vmatprep.subr.mxu0 0.0
    %192 = vmatpush1.msra.mxu0 %v173
    %193 = vmatprep.subr.mxu0 0.0
    %194 = vmatpush1.msra.mxu0 %v172
    %195 = vmatprep.subr.mxu0 0.0
    %196 = vmatpush1.msra.mxu0 %v171
    %197 = vmatprep.subr.mxu0 0.0
    %198 = vmatpush1.msra.mxu0 %v170
    %199 = vmatprep.subr.mxu0 0.0
    %200 = vmatpush1.msra.mxu0 %v169
    %201 = vmatprep.subr.mxu0 0.0
    %202 = vmatpush1.msra.mxu0 %v168
    %203 = vmatprep.subr.mxu0 0.0
    %204 = vmatpush1.msra.mxu0 %v167
    %205 = vmatprep.subr.mxu0 0.0
    %206 = vmatpush1.msra.mxu0 %v166
    %207 = vmatprep.subr.mxu0 0.0
    %208 = vmatpush1.msra.mxu0 %v165
    %209 = vmatprep.subr.mxu0 0.0
    %210 = vmatpush1.msra.mxu0 %v164
    %211 = vmatprep.subr.mxu0 0.0
    %212 = vmatpush1.msra.mxu0 %v163
    %213 = vmatprep.subr.mxu0 0.0
    %214 = vmatpush1.msra.mxu0 %v162
    %215 = vmatprep.subr.mxu0 0.0
    %216 = vmatpush1.msra.mxu0 %v161
    %217 = vmatprep.subr.mxu0 0.0
    %218 = vmatpush2.msra.mxu0 0.0
    %219 = vmatprep.subr.mxu0 0.0
    %220 = vmatpush2.msra.mxu0 0.0
    %221 = vmatprep.subr.mxu0 0.0
    %222 = vmatpush2.msra.mxu0 0.0
    %223 = vmatprep.subr.mxu0 0.0
    %224 = vmatpush2.msra.mxu0 0.0
    %225 = vmatprep.subr.mxu0 0.0
    %226 = vmatpush2.msra.mxu0 0.0
    %227 = vmatprep.subr.mxu0 0.0
    %228 = vmatpush2.msra.mxu0 0.0
    %229 = vmatprep.subr.mxu0 0.0
    %230 = vmatpush2.msra.mxu0 0.0
    %231 = vmatprep.subr.mxu0 0.0
    %232 = vmatpush2.msra.mxu0 0.0
    %233 = vmatprep.subr.mxu0 0.0
    %234 = vmatpush2.msra.mxu0 0.0
    %235 = vmatprep.subr.mxu0 0.0
    %236 = vmatpush2.msra.mxu0 0.0
    %237 = vmatprep.subr.mxu0 0.0
    %238 = vmatpush2.msra.mxu0 0.0
    %239 = vmatprep.subr.mxu0 0.0
    %240 = vmatpush2.msra.mxu0 0.0
    %241 = vmatprep.subr.mxu0 0.0
    %242 = vmatpush2.msra.mxu0 0.0
    %243 = vmatprep.subr.mxu0 0.0
    %244 = vmatpush2.msra.mxu0 0.0
    %245 = vmatprep.subr.mxu0 0.0
    %246 = vmatpush2.msra.mxu0 0.0
    %247 = vmatprep.subr.mxu0 0.0
    %248 = vmatpush2.msra.mxu0 0.0
    %249 = vmatprep.mubr.f32.mxu0 0.0
    %250 = vmatmul.mubr.f32.gmra.mxu0 %v159
    %v251 = vpop.f32.mrf.mxu0
    %v252 = vadd.f32 %v183, %v251
    %v253 = vpop.f32.mrf.mxu0
    %254 = vmatprep.mubr.f32.mxu0 0.0
    %255 = vmatmul.mubr.f32.gmra.mxu0 %v160
    %v256 = vpop.f32.mrf.mxu0
    %v257 = vadd.f32 %v183, %v256
    %v258 = vpop.f32.mrf.mxu0
    %259 = vdwg.mxu0
    %v260 = vmax.f32 %v252, 0.0
    %v261 = vmax.f32 %v257, 0.0
    %s262 = scalar_lea.vmem [#allocation7], 128
    %v263 = vld [vmem:[%s262] sm:$0xff]
    %v264 = vld [vmem:[%s262 + $0x8] sm:$0xff]
    %v265 = vld [vmem:[%s262 + $0x10] sm:$0xff]
    %v266 = vld [vmem:[%s262 + $0x18] sm:$0xff]
    %v267 = vld [vmem:[%s262 + $0x20] sm:$0xff]
    %v268 = vld [vmem:[%s262 + $0x28] sm:$0xff]
    %v269 = vld [vmem:[%s262 + $0x30] sm:$0xff]
    %v270 = vld [vmem:[%s262 + $0x38] sm:$0xff]
    %v271 = vld [vmem:[%s262 + $0x40] sm:$0xff]
    %v272 = vld [vmem:[%s262 + $0x48] sm:$0xff]
    %v273 = vld [vmem:[%s262 + $0x50] sm:$0xff]
    %v274 = vld [vmem:[%s262 + $0x58] sm:$0xff]
    %v275 = vld [vmem:[%s262 + $0x60] sm:$0xff]
    %v276 = vld [vmem:[%s262 + $0x68] sm:$0xff]
    %v277 = vld [vmem:[%s262 + $0x70] sm:$0xff]
    %v278 = vld [vmem:[%s262 + $0x78] sm:$0xff]
    %s279 = scalar_lea.vmem %s3, 2
    %v280 = vld [vmem:[%s279] sm:$0x1]
    %v282 = vlaneseq
    %v283 = vshrl.u32 %v282, 7
    %v284 = vsub.s32 0, %v283
    %v285 = vrot.slane %v280, %v284
    %287 = vmatprep.subr.mxu0 0.0
    %288 = vmatpush1.msra.mxu0 %v278
    %289 = vmatprep.subr.mxu0 0.0
    %290 = vmatpush1.msra.mxu0 %v277
    %291 = vmatprep.subr.mxu0 0.0
    %292 = vmatpush1.msra.mxu0 %v276
    %293 = vmatprep.subr.mxu0 0.0
    %294 = vmatpush1.msra.mxu0 %v275
    %295 = vmatprep.subr.mxu0 0.0
    %296 = vmatpush1.msra.mxu0 %v274
    %297 = vmatprep.subr.mxu0 0.0
    %298 = vmatpush1.msra.mxu0 %v273
    %299 = vmatprep.subr.mxu0 0.0
    %300 = vmatpush1.msra.mxu0 %v272
    %301 = vmatprep.subr.mxu0 0.0
    %302 = vmatpush1.msra.mxu0 %v271
    %303 = vmatprep.subr.mxu0 0.0
    %304 = vmatpush1.msra.mxu0 %v270
    %305 = vmatprep.subr.mxu0 0.0
    %306 = vmatpush1.msra.mxu0 %v269
    %307 = vmatprep.subr.mxu0 0.0
    %308 = vmatpush1.msra.mxu0 %v268
    %309 = vmatprep.subr.mxu0 0.0
    %310 = vmatpush1.msra.mxu0 %v267
    %311 = vmatprep.subr.mxu0 0.0
    %312 = vmatpush1.msra.mxu0 %v266
    %313 = vmatprep.subr.mxu0 0.0
    %314 = vmatpush1.msra.mxu0 %v265
    %315 = vmatprep.subr.mxu0 0.0
    %316 = vmatpush1.msra.mxu0 %v264
    %317 = vmatprep.subr.mxu0 0.0
    %318 = vmatpush1.msra.mxu0 %v263
    %319 = vmatprep.subr.mxu0 0.0
    %320 = vmatpush2.msra.mxu0 0.0
    %321 = vmatprep.subr.mxu0 0.0
    %322 = vmatpush2.msra.mxu0 0.0
    %323 = vmatprep.subr.mxu0 0.0
    %324 = vmatpush2.msra.mxu0 0.0
    %325 = vmatprep.subr.mxu0 0.0
    %326 = vmatpush2.msra.mxu0 0.0
    %327 = vmatprep.subr.mxu0 0.0
    %328 = vmatpush2.msra.mxu0 0.0
    %329 = vmatprep.subr.mxu0 0.0
    %330 = vmatpush2.msra.mxu0 0.0
    %331 = vmatprep.subr.mxu0 0.0
    %332 = vmatpush2.msra.mxu0 0.0
    %333 = vmatprep.subr.mxu0 0.0
    %334 = vmatpush2.msra.mxu0 0.0
    %335 = vmatprep.subr.mxu0 0.0
    %336 = vmatpush2.msra.mxu0 0.0
    %337 = vmatprep.subr.mxu0 0.0
    %338 = vmatpush2.msra.mxu0 0.0
    %339 = vmatprep.subr.mxu0 0.0
    %340 = vmatpush2.msra.mxu0 0.0
    %341 = vmatprep.subr.mxu0 0.0
    %342 = vmatpush2.msra.mxu0 0.0
    %343 = vmatprep.subr.mxu0 0.0
    %344 = vmatpush2.msra.mxu0 0.0
    %345 = vmatprep.subr.mxu0 0.0
    %346 = vmatpush2.msra.mxu0 0.0
    %347 = vmatprep.subr.mxu0 0.0
    %348 = vmatpush2.msra.mxu0 0.0
    %349 = vmatprep.subr.mxu0 0.0
    %350 = vmatpush2.msra.mxu0 0.0
    %351 = vmatprep.mubr.f32.mxu0 0.0
    %352 = vmatmul.mubr.f32.gmra.mxu0 %v260
    %v353 = vpop.f32.mrf.mxu0
    %v354 = vadd.f32 %v285, %v353
    %v355 = vpop.f32.mrf.mxu0
    %356 = vmatprep.mubr.f32.mxu0 0.0
    %357 = vmatmul.mubr.f32.gmra.mxu0 %v261
    %v358 = vpop.f32.mrf.mxu0
    %v359 = vadd.f32 %v285, %v358
    %v360 = vpop.f32.mrf.mxu0
    %361 = vdwg.mxu0
    %362 = vst [vmem:[#allocation8] sm:$0xff] %v354
    %363 = vst [vmem:[#allocation8 + $0x8] sm:$0xff] %v359
    // Predicated region
    $region30: #{tpu_custom_call.1} parent=1 // pred_check
      _
    $region31: #{tpu_custom_call.1} parent=1 // pred_check_branch
      %365 = sbr.rel (0) target = $region33
    $region32: #{tpu_custom_call.1} parent=1 // pred_region
      %s367 = ssub.s32 256, 256
      %368 = vsyncadd [#allocation4], %s367
      %s369 = sshll.u32 [#allocation8], 4
      %s370 = int_to_ptr.vmem [resolvable:$true] %s369
      %375 = dma.vmem_to_hbm [thread:$0]  %s370, 256, %s4, [#allocation4], 128, 128, 8
    $region33: #{tpu_custom_call.1} parent=1 // pred_fallthru
      _
    // Predicated region
    $region34: #{tpu_custom_call.1} parent=1 // pred_check
      _
    $region35: #{tpu_custom_call.1} parent=1 // pred_check_branch
      %377 = sbr.rel (0) target = $region37
    $region36: #{tpu_custom_call.1} parent=1 // pred_region
      %378 = dma.done [#allocation4], 256
    $region37: #{tpu_custom_call.1} parent=1 // pred_fallthru
      _
    %379 = vsyncpa [#allocation3], 1
    %380 = vsyncpa [#allocation6], 1
    %381 = vsyncpa [#allocation4], 1

</llo_original>
